<compile_context>
chip_gen: v7x
topology: tpu7x:2x2x1
jax: 0.10.0
libtpu: 0.0.40
codegen_flags: <defaults>
</compile_context>

<pallas_src>
import jax
import jax.numpy as jnp
from jax.experimental import pallas as pl
from jax.experimental.pallas import tpu as pltpu


def _symmetry_kernel(x_ref, xb_ref, o_ref):
    # x_ref : (1, 3, L)       minuend    x[c, t*V + i]    = x[n, c, t, i]
    # xb_ref: (1, 3, tj, L)   subtrahend xb[c, j, t*V+i]  = x[n, c, t, j]
    # o_ref : (1, 3, tj, L)   o[k, j, t*V+i], k: 0=radius, 1=azimuth, 2=colat
    eps = jnp.float32(1e-07)
    xi = x_ref[0]                      # (3, L)
    xj = xb_ref[0]                     # (3, tj, L)

    d0 = xi[0:1, :] - xj[0]            # (tj, L)
    d1 = xi[1:2, :] - xj[1]
    d2 = xi[2:3, :] - xj[2]

    s01 = d0 * d0 + d1 * d1            # shared by radius & colatitude
    o_ref[0, 0] = jnp.sqrt(s01 + d2 * d2 + eps).astype(o_ref.dtype)
    o_ref[0, 1] = jnp.arctan2(d1 + eps, d0 + eps).astype(o_ref.dtype)
    o_ref[0, 2] = jnp.arctan2(jnp.sqrt(s01 + eps), d2).astype(o_ref.dtype)


def symmetry_module_forward(x, l=None):
    """x: (N, 3, T, V) float32. `l` is unused by the PyTorch forward."""
    N, C, T, V = x.shape
    assert C == 3, "symmetry_module expects 3 coordinate channels"
    L = T * V

    # Lane-dense minuend: free reshape, x_flat[n, c, t*V + i] = x[n, c, t, i].
    x_flat = x.reshape(N, 3, L)
    # Lane-dense subtrahend: xb[n, c, j, t*V + i] = x[n, c, t, j].
    xt = jnp.transpose(x, (0, 1, 3, 2))                               # (N,3,V,T)
    xb = jnp.broadcast_to(xt[..., None], (N, 3, V, T, V)).reshape(N, 3, V, L)

    # j-tile: a multiple of 8 that divides V (BlockSpec constraint), else full V.
    tj = V
    for cand in (32, 16, 8):
        if V % cand == 0:
            tj = cand
            break
    n_jb = V // tj

    out4 = pl.pallas_call(
        _symmetry_kernel,
        out_shape=jax.ShapeDtypeStruct((N, 3, V, L), x.dtype),
        grid_spec=pltpu.PrefetchScalarGridSpec(
            num_scalar_prefetch=0,
            grid=(N, n_jb),
            in_specs=[
                pl.BlockSpec((1, 3, L), lambda n, jb: (n, 0, 0)),
                pl.BlockSpec((1, 3, tj, L), lambda n, jb: (n, 0, jb, 0)),
            ],
            out_specs=pl.BlockSpec((1, 3, tj, L), lambda n, jb: (n, 0, jb, 0)),
        ),
        compiler_params=pltpu.CompilerParams(
            dimension_semantics=("parallel", "parallel"),
            vmem_limit_bytes=64 * 1024 * 1024,
        ),
    )(x_flat, xb)

    # (N, 3, V, T*V) -> (N, 3*V, T, V): contiguous regrouping (free).
    # channel = k*V + j  == torch permute(0,1,4,2,3).view(N, -1, T, V).
    return out4.reshape(N, 3 * V, T, V)


def _reference(x):
    """Pure-JAX transcription of the torch forward (for self-check)."""
    eps = 1e-07
    d = x[:, :, :, :, None] - x[:, :, :, None, :]          # (N,3,T,Vi,Vj)
    d0, d1, d2 = d[:, 0], d[:, 1], d[:, 2]
    radius = jnp.sqrt(d0 ** 2 + d1 ** 2 + d2 ** 2 + eps)
    azimuth = jnp.arctan2(d1 + eps, d0 + eps)
    colat = jnp.arctan2(jnp.sqrt(d0 ** 2 + d1 ** 2 + eps), d2)
    feat = jnp.stack([radius, azimuth, colat], axis=1)      # (N,3,T,Vi,Vj)
    feat = jnp.transpose(feat, (0, 1, 4, 2, 3))             # (N,3,Vj,T,Vi)
    N, _, V, T, _ = feat.shape
    return feat.reshape(N, 3 * V, T, V)


if __name__ == "__main__":
    # Module has no learnable parameters, so nothing to initialize.
    key = jax.random.PRNGKey(0)
    N, C, T, V = 2, 3, 8, 6
    x = jax.random.normal(key, (N, C, T, V), dtype=jnp.float32)

    out = symmetry_module_forward(x, l=2)   # `l` unused, as in the torch forward
    out = jax.block_until_ready(out)

    ref = _reference(x)
    assert out.shape == (N, 3 * V, T, V)
    err = float(jnp.max(jnp.abs(out - ref)))
    assert jnp.allclose(out, ref, rtol=1e-3, atol=1e-3), err
    # TODO(synk): Spherical_harm (scipy.special.sph_harm) is defined in the
    # module but never invoked by forward(); it is intentionally not ported.
    print("KERNEL_OK")
</pallas_src>

<mosaic_0001>
module attributes {stable_mosaic.version = 11 : i64} {
  func.func @_symmetry_kernel(%arg0: i32, %arg1: i32, %arg2: memref<1x3x48xf32, #tpu.memory_space<vmem>>, %arg3: memref<1x3x6x48xf32, #tpu.memory_space<vmem>>, %arg4: memref<1x3x6x48xf32, #tpu.memory_space<vmem>>) attributes {dimension_semantics = [#tpu.dimension_semantics<parallel>, #tpu.dimension_semantics<parallel>], iteration_bounds = array<i64: 2, 1>, scalar_prefetch = 0 : i64, scratch_operands = 0 : i64, tpu.core_type = #tpu.core_type<tc>, window_params = [{transform_indices = @transform_0, window_bounds = array<i64: 1, 3, 48>}, {transform_indices = @transform_1, window_bounds = array<i64: 1, 3, 6, 48>}, {transform_indices = @transform_2, window_bounds = array<i64: 1, 3, 6, 48>}]} {
    %c0 = arith.constant 0 : index
    %c0_0 = arith.constant 0 : index
    %c0_1 = arith.constant 0 : index
    %0 = vector.load %arg2[%c0, %c0_0, %c0_1] : memref<1x3x48xf32, #tpu.memory_space<vmem>>, vector<1x3x48xf32>
    %1 = vector.shape_cast %0 : vector<1x3x48xf32> to vector<3x48xf32>
    %c0_2 = arith.constant 0 : index
    %c0_3 = arith.constant 0 : index
    %c0_4 = arith.constant 0 : index
    %c0_5 = arith.constant 0 : index
    %2 = vector.load %arg3[%c0_2, %c0_3, %c0_4, %c0_5] : memref<1x3x6x48xf32, #tpu.memory_space<vmem>>, vector<1x3x6x48xf32>
    %3 = vector.shape_cast %2 : vector<1x3x6x48xf32> to vector<3x6x48xf32>
    %4 = vector.extract_strided_slice %1 {offsets = [0, 0], sizes = [1, 48], strides = [1, 1]} : vector<3x48xf32> to vector<1x48xf32>
    %5 = vector.extract_strided_slice %3 {offsets = [0, 0, 0], sizes = [1, 6, 48], strides = [1, 1, 1]} : vector<3x6x48xf32> to vector<1x6x48xf32>
    %6 = vector.shape_cast %5 : vector<1x6x48xf32> to vector<6x48xf32>
    %7 = vector.broadcast %4 : vector<1x48xf32> to vector<6x48xf32>
    %8 = arith.subf %7, %6 : vector<6x48xf32>
    %9 = vector.extract_strided_slice %1 {offsets = [1, 0], sizes = [1, 48], strides = [1, 1]} : vector<3x48xf32> to vector<1x48xf32>
    %10 = vector.extract_strided_slice %3 {offsets = [1, 0, 0], sizes = [1, 6, 48], strides = [1, 1, 1]} : vector<3x6x48xf32> to vector<1x6x48xf32>
    %11 = vector.shape_cast %10 : vector<1x6x48xf32> to vector<6x48xf32>
    %12 = vector.broadcast %9 : vector<1x48xf32> to vector<6x48xf32>
    %13 = arith.subf %12, %11 : vector<6x48xf32>
    %14 = vector.extract_strided_slice %1 {offsets = [2, 0], sizes = [1, 48], strides = [1, 1]} : vector<3x48xf32> to vector<1x48xf32>
    %15 = vector.extract_strided_slice %3 {offsets = [2, 0, 0], sizes = [1, 6, 48], strides = [1, 1, 1]} : vector<3x6x48xf32> to vector<1x6x48xf32>
    %16 = vector.shape_cast %15 : vector<1x6x48xf32> to vector<6x48xf32>
    %17 = vector.broadcast %14 : vector<1x48xf32> to vector<6x48xf32>
    %18 = arith.subf %17, %16 : vector<6x48xf32>
    %19 = arith.mulf %8, %8 : vector<6x48xf32>
    %20 = arith.mulf %13, %13 : vector<6x48xf32>
    %21 = arith.addf %19, %20 : vector<6x48xf32>
    %22 = arith.mulf %18, %18 : vector<6x48xf32>
    %23 = arith.addf %21, %22 : vector<6x48xf32>
    %cst = arith.constant 1.000000e-07 : f32
    %24 = vector.broadcast %cst : f32 to vector<6x48xf32>
    %25 = arith.addf %23, %24 : vector<6x48xf32>
    %26 = math.sqrt %25 : vector<6x48xf32>
    %c0_6 = arith.constant 0 : index
    %c0_7 = arith.constant 0 : index
    %c0_8 = arith.constant 0 : index
    %c0_9 = arith.constant 0 : index
    %27 = vector.load %arg4[%c0_6, %c0_7, %c0_8, %c0_9] : memref<1x3x6x48xf32, #tpu.memory_space<vmem>>, vector<1x1x6x48xf32>
    %28 = vector.shape_cast %27 : vector<1x1x6x48xf32> to vector<6x48xf32>
    %29 = vector.shape_cast %26 : vector<6x48xf32> to vector<1x1x6x48xf32>
    tpu.vector_store %arg4[%c0_6, %c0_7, %c0_8, %c0_9], %29 {strides = array<i32>} : memref<1x3x6x48xf32, #tpu.memory_space<vmem>>, vector<1x1x6x48xf32>,
    %cst_10 = arith.constant 1.000000e-07 : f32
    %30 = vector.broadcast %cst_10 : f32 to vector<6x48xf32>
    %31 = arith.addf %13, %30 : vector<6x48xf32>
    %cst_11 = arith.constant 1.000000e-07 : f32
    %32 = vector.broadcast %cst_11 : f32 to vector<6x48xf32>
    %33 = arith.addf %8, %32 : vector<6x48xf32>
    %34 = math.atan2 %31, %33 : vector<6x48xf32>
    %c0_12 = arith.constant 0 : index
    %c1 = arith.constant 1 : index
    %c0_13 = arith.constant 0 : index
    %c0_14 = arith.constant 0 : index
    %35 = vector.load %arg4[%c0_12, %c1, %c0_13, %c0_14] : memref<1x3x6x48xf32, #tpu.memory_space<vmem>>, vector<1x1x6x48xf32>
    %36 = vector.shape_cast %35 : vector<1x1x6x48xf32> to vector<6x48xf32>
    %37 = vector.shape_cast %34 : vector<6x48xf32> to vector<1x1x6x48xf32>
    tpu.vector_store %arg4[%c0_12, %c1, %c0_13, %c0_14], %37 {strides = array<i32>} : memref<1x3x6x48xf32, #tpu.memory_space<vmem>>, vector<1x1x6x48xf32>,
    %cst_15 = arith.constant 1.000000e-07 : f32
    %38 = vector.broadcast %cst_15 : f32 to vector<6x48xf32>
    %39 = arith.addf %21, %38 : vector<6x48xf32>
    %40 = math.sqrt %39 : vector<6x48xf32>
    %41 = math.atan2 %40, %18 : vector<6x48xf32>
    %c0_16 = arith.constant 0 : index
    %c2 = arith.constant 2 : index
    %c0_17 = arith.constant 0 : index
    %c0_18 = arith.constant 0 : index
    %42 = vector.load %arg4[%c0_16, %c2, %c0_17, %c0_18] : memref<1x3x6x48xf32, #tpu.memory_space<vmem>>, vector<1x1x6x48xf32>
    %43 = vector.shape_cast %42 : vector<1x1x6x48xf32> to vector<6x48xf32>
    %44 = vector.shape_cast %41 : vector<6x48xf32> to vector<1x1x6x48xf32>
    tpu.vector_store %arg4[%c0_16, %c2, %c0_17, %c0_18], %44 {strides = array<i32>} : memref<1x3x6x48xf32, #tpu.memory_space<vmem>>, vector<1x1x6x48xf32>,
    return
  }
  func.func @transform_0(%arg0: i32, %arg1: i32) -> (i32, i32, i32) {
    %c0_i32 = arith.constant 0 : i32
    %c0_i32_0 = arith.constant 0 : i32
    %c0_i32_1 = arith.constant 0 : i32
    return %arg0, %c0_i32, %c0_i32_0 : i32, i32, i32
  }
  func.func @transform_1(%arg0: i32, %arg1: i32) -> (i32, i32, i32, i32) {
    %c0_i32 = arith.constant 0 : i32
    %c0_i32_0 = arith.constant 0 : i32
    %c0_i32_1 = arith.constant 0 : i32
    return %arg0, %c0_i32, %arg1, %c0_i32_0 : i32, i32, i32, i32
  }
  func.func @transform_2(%arg0: i32, %arg1: i32) -> (i32, i32, i32, i32) {
    %c0_i32 = arith.constant 0 : i32
    %c0_i32_0 = arith.constant 0 : i32
    %c0_i32_1 = arith.constant 0 : i32
    return %arg0, %c0_i32, %arg1, %c0_i32_0 : i32, i32, i32, i32
  }
}

</mosaic_0001>

<llo_original>
// kernel: tpu_custom_call.1
$region0: #{tpu_custom_call.1}
  #allocation0 [shape = 'u32[]', space=smem, size = 0x4, offset = 0x4, fixed_abs, tag = 'smem constant byte address 0x4 - core index']
  #allocation1 [shape = 'u32[144,128]{1,0:T(1,128)}', space=vmem, size = 0x12000, scoped, tag = 'internal scratch']
  %s0 = inlined_call_operand.hbm [shape: f32[2,3,48], index: 0, kind: input, shape index: {}]
  %s1 = inlined_call_operand.hbm [shape: f32[2,3,6,48], index: 1, kind: input, shape index: {}]
  %s2 = inlined_call_operand.hbm [shape: f32[2,3,6,48], index: 2, kind: output, shape index: {}]
  %s3 = sld [smem:[#allocation0]]
  $region49: #{tpu_custom_call.1} parent=0
    _
  %s5 = ssub.s32 1, %s3
  %s6 = scalar_select 0, %s5, %s3
  $region1: #{tpu_custom_call.1} parent=0
    #allocation2 [shape = 'u8[4096]{0}', space=vmem, size = 0x1000, scoped, tag = 'input window, operand 0']
    #allocation3 [shape = 's32[2]{0}', space=sflag, size = 0x8, scoped, tag = 'scoped memory for tpu_custom_call.1']
    #allocation4 [shape = 's32[2]{0}', space=sflag, size = 0x8, scoped, tag = 'scoped memory for tpu_custom_call.1']
    #allocation5 [shape = 'u8[24576]{0}', space=vmem, size = 0x6000, scoped, tag = 'input window, operand 1']
    #allocation6 [shape = 's32[2]{0}', space=sflag, size = 0x8, scoped, tag = 'scoped memory for tpu_custom_call.1']
    #allocation7 [shape = 'u8[24576]{0}', space=vmem, size = 0x6000, scoped, tag = 'output window, operand 0']
    %7 = vsyncpa [#allocation3], 0
    %s8 = scalar_lea.sflag [#allocation3], 1
    %9 = vsyncpa %s8, 0
    %10 = vsyncpa [#allocation6], 0
    %s11 = scalar_lea.sflag [#allocation6], 1
    %12 = vsyncpa %s11, 0
    %13 = vsyncpa [#allocation4], 0
    %s14 = scalar_lea.sflag [#allocation4], 1
    %15 = vsyncpa %s14, 0
    loop: start=0, step=1, limit=4
    $region2: #{tpu_custom_call.1} parent=1 // loop_pre_header
      _
    $region3: #{tpu_custom_call.1} parent=1 // loop_header
      %s17 = sphi 0, %s21
      %p18 = scmp.ge.s32.totalorder %s17, 4
      %s24 = sphi 0, %s36
      %s25 = sphi 0, %s32
      %s26 = sphi 0, %s24
      %s27 = sphi 0, %s25
      %s28 = sphi 0, %s26
      %s29 = sphi 0, %s27
      %s39 = sphi 0, %s41
      %s42 = sphi 0, %s39
      %s43 = sphi 0, %s42
      %s59 = sphi 0, %s43
      %s67 = sphi 0, %s69
      %s70 = sphi 0, %s67
      %s71 = sphi 0, %s70
      %s87 = sphi 0, %s71
      %s95 = sphi 0, %s97
      %s98 = sphi 0, %s95
      %s99 = sphi 0, %s98
      %s115 = sphi 0, %s99
    $region4: #{tpu_custom_call.1} parent=1 // loop_header_branch
      %20 = sbr.rel (%p18) target = $region8
    $region5: #{tpu_custom_call.1} parent=1 // loop_body
      %s22 = ssub.s32 %s17, 1
      %s23 = ssub.s32 %s17, 2
      %s30 = sadd.s32 1, %s25
      %p31 = scmp.ge.s32.totalorder %s30, 1
      %s32 = scalar_select %p31, 0, %s30
      %s33 = sadd.s32 1, %s24
      %s34 = scalar_select %p31, %s33, %s24
      %p35 = scmp.ge.s32.totalorder %s34, 2
      %s36 = scalar_select %p35, 0, %s34
      %s37 = ssub.s32 %s24, %s36
      %p38 = scmp.eq.s32.totalorder %s37, 0
      %s40 = sadd.s32 %s39, 1
      %s41 = scalar_select %p38, %s39, %s40
      %p44 = pneg %p38
      %p45 = scmp.eq.s32.totalorder %s17, 1
      %p46 = por %p44, %p45
      %p47 = scmp.ne.s32.totalorder %s39, %s42
      %p48 = scmp.eq.s32.totalorder %s17, 0
      %p49 = por %p47, %p48
      %p50 = scmp.ne.s32.totalorder %s39, %s42
      %p51 = scmp.eq.s32.totalorder %s22, 1
      %p52 = por %p50, %p51
      %p53 = scmp.ne.s32.totalorder %s42, %s43
      %p54 = scmp.eq.s32.totalorder %s22, 0
      %p55 = por %p53, %p54
      %p56 = scmp.ne.s32.totalorder %s42, %s43
      %p57 = scmp.eq.s32.totalorder %s23, 1
      %p58 = por %p56, %p57
      %p60 = scmp.ne.s32.totalorder %s43, %s59
      %p61 = scmp.eq.s32.totalorder %s23, 0
      %p62 = por %p60, %p61
      %s63 = ssub.s32 %s24, %s36
      %s64 = ssub.s32 %s25, %s32
      %s65 = sor.u32 %s63, %s64
      %p66 = scmp.eq.s32.totalorder %s65, 0
      %s68 = sadd.s32 %s67, 1
      %s69 = scalar_select %p66, %s67, %s68
      %p72 = pneg %p66
      %p73 = scmp.eq.s32.totalorder %s17, 1
      %p74 = por %p72, %p73
      %p75 = scmp.ne.s32.totalorder %s67, %s70
      %p76 = scmp.eq.s32.totalorder %s17, 0
      %p77 = por %p75, %p76
      %p78 = scmp.ne.s32.totalorder %s67, %s70
      %p79 = scmp.eq.s32.totalorder %s22, 1
      %p80 = por %p78, %p79
      %p81 = scmp.ne.s32.totalorder %s70, %s71
      %p82 = scmp.eq.s32.totalorder %s22, 0
      %p83 = por %p81, %p82
      %p84 = scmp.ne.s32.totalorder %s70, %s71
      %p85 = scmp.eq.s32.totalorder %s23, 1
      %p86 = por %p84, %p85
      %p88 = scmp.ne.s32.totalorder %s71, %s87
      %p89 = scmp.eq.s32.totalorder %s23, 0
      %p90 = por %p88, %p89
      %s91 = ssub.s32 %s24, %s36
      %s92 = ssub.s32 %s25, %s32
      %s93 = sor.u32 %s91, %s92
      %p94 = scmp.eq.s32.totalorder %s93, 0
      %s96 = sadd.s32 %s95, 1
      %s97 = scalar_select %p94, %s95, %s96
      %p100 = pneg %p94
      %p101 = scmp.eq.s32.totalorder %s17, 1
      %p102 = por %p100, %p101
      %p103 = scmp.ne.s32.totalorder %s95, %s98
      %p104 = scmp.eq.s32.totalorder %s17, 0
      %p105 = por %p103, %p104
      %p106 = scmp.ne.s32.totalorder %s95, %s98
      %p107 = scmp.eq.s32.totalorder %s22, 1
      %p108 = por %p106, %p107
      %p109 = scmp.ne.s32.totalorder %s98, %s99
      %p110 = scmp.eq.s32.totalorder %s22, 0
      %p111 = por %p109, %p110
      %p112 = scmp.ne.s32.totalorder %s98, %s99
      %p113 = scmp.eq.s32.totalorder %s23, 1
      %p114 = por %p112, %p113
      %p116 = scmp.ne.s32.totalorder %s99, %s115
      %p117 = scmp.eq.s32.totalorder %s23, 0
      %p118 = por %p116, %p117
      %p119 = scmp.le.s32.totalorder 1, %s17
      %p120 = scmp.lt.s32.totalorder %s17, 3
      %p121 = pnand %p119, %p120
      %p122 = pneg %p121
      // Predicated region
      $region9: #{tpu_custom_call.1} parent=5 // pred_check
        _
      $region10: #{tpu_custom_call.1} parent=5 // pred_check_branch
        %124 = sbr.rel (%p121) target = $region12
      $region11: #{tpu_custom_call.1} parent=5 // pred_region
        %s125 = ssub.s32 %s17, 1
      $region12: #{tpu_custom_call.1} parent=5 // pred_fallthru
        _
      %p126 = scmp.lt.s32.totalorder %s17, 2
      // Predicated region
      $region13: #{tpu_custom_call.1} parent=5 // pred_check
        %p127 = pneg %p126
      $region14: #{tpu_custom_call.1} parent=5 // pred_check_branch
        %129 = sbr.rel (%p127) target = $region16
      $region15: #{tpu_custom_call.1} parent=5 // pred_region
        // Predicated region
        $region17: #{tpu_custom_call.1} parent=15 // pred_check
          %p130 = pneg %p49
        $region18: #{tpu_custom_call.1} parent=15 // pred_check_branch
          %132 = sbr.rel (%p130) target = $region20
        $region19: #{tpu_custom_call.1} parent=15 // pred_region
          %s133 = sand.u32 %s39, 1
          %s134 = scalar_lea.sflag [#allocation3], %s133
          %s135 = sand.u32 %s39, 1
          %s136 = smul.addr %s135, 4
          %s137 = scalar_lea.vmem [#allocation2], %s136
          %s139 = ssub.s32 64, 64
          %140 = vsyncadd %s134, %s139
          %s141 = smul.addr %s24, 64
          %s142 = scalar_lea.hbm %s0, %s141
          %s144 = sshll.u32 %s137, 4
          %s145 = int_to_ptr.vmem [resolvable:$true] %s144
          %147 = dma.hbm_to_vmem [thread:$0]  %s142, 64, %s145, %s134
        $region20: #{tpu_custom_call.1} parent=15 // pred_fallthru
          _
        // Predicated region
        $region21: #{tpu_custom_call.1} parent=15 // pred_check
          %p148 = pneg %p77
        $region22: #{tpu_custom_call.1} parent=15 // pred_check_branch
          %150 = sbr.rel (%p148) target = $region24
        $region23: #{tpu_custom_call.1} parent=15 // pred_region
          %s151 = sand.u32 %s67, 1
          %s152 = scalar_lea.sflag [#allocation6], %s151
          %s153 = sand.u32 %s67, 1
          %s154 = smul.addr %s153, 24
          %s155 = scalar_lea.vmem [#allocation5], %s154
          %s157 = ssub.s32 384, 384
          %158 = vsyncadd %s152, %s157
          %s159 = smul.addr %s24, 3
          %s160 = sadd.s32 %s25, %s159
          %s161 = smul.addr %s160, 128
          %s162 = scalar_lea.hbm %s1, %s161
          %s163 = sshll.u32 %s155, 4
          %s164 = int_to_ptr.vmem [resolvable:$true] %s163
          %169 = dma.hbm_to_vmem [thread:$0]  %s162, 384, %s164, %s152, 128, 128, 8
        $region24: #{tpu_custom_call.1} parent=15 // pred_fallthru
          _
      $region16: #{tpu_custom_call.1} parent=5 // pred_fallthru
        _
      %p170 = scmp.le.s32.totalorder 1, %s17
      %p171 = scmp.lt.s32.totalorder %s17, 3
      %p172 = pnand %p170, %p171
      %p173 = pneg %p172
      // Predicated region
      $region25: #{tpu_custom_call.1} parent=5 // pred_check
        _
      $region26: #{tpu_custom_call.1} parent=5 // pred_check_branch
        %175 = sbr.rel (%p172) target = $region28
      $region27: #{tpu_custom_call.1} parent=5 // pred_region
        %s176 = ssub.s32 %s17, 1
        %s177 = sand.u32 %s42, 1
        %s178 = scalar_lea.sflag [#allocation3], %s177
        %s179 = sand.u32 %s42, 1
        %s180 = smul.addr %s179, 4
        %s181 = scalar_lea.vmem [#allocation2], %s180
        // Predicated region
        $region29: #{tpu_custom_call.1} parent=27 // pred_check
          %p182 = pneg %p55
        $region30: #{tpu_custom_call.1} parent=27 // pred_check_branch
          %184 = sbr.rel (%p182) target = $region32
        $region31: #{tpu_custom_call.1} parent=27 // pred_region
          %185 = dma.done %s178, 64
        $region32: #{tpu_custom_call.1} parent=27 // pred_fallthru
          _
        %s186 = sand.u32 %s70, 1
        %s187 = scalar_lea.sflag [#allocation6], %s186
        %s188 = sand.u32 %s70, 1
        %s189 = smul.addr %s188, 24
        %s190 = scalar_lea.vmem [#allocation5], %s189
        // Predicated region
        $region33: #{tpu_custom_call.1} parent=27 // pred_check
          %p191 = pneg %p83
        $region34: #{tpu_custom_call.1} parent=27 // pred_check_branch
          %193 = sbr.rel (%p191) target = $region36
        $region35: #{tpu_custom_call.1} parent=27 // pred_region
          %194 = dma.done %s187, 384
        $region36: #{tpu_custom_call.1} parent=27 // pred_fallthru
          _
        %s195 = sand.u32 %s42, 1
        %s196 = scalar_lea.sflag [#allocation3], %s195
        %s197 = sand.u32 %s42, 1
        %s198 = smul.addr %s197, 4
        %s199 = scalar_lea.vmem [#allocation2], %s198
        %p200 = pneg %p55
        %p201 = pneg %p52
        %s202 = sand.u32 %s70, 1
        %s203 = scalar_lea.sflag [#allocation6], %s202
        %s204 = sand.u32 %s70, 1
        %s205 = smul.addr %s204, 24
        %s206 = scalar_lea.vmem [#allocation5], %s205
        %p207 = pneg %p83
        %p208 = pneg %p80
        %p209 = pneg %p111
        %p210 = pneg %p108
        %s211 = sand.u32 %s98, 1
        %s212 = scalar_lea.sflag [#allocation4], %s211
        %s213 = sand.u32 %s98, 1
        %s214 = smul.addr %s213, 24
        %s215 = scalar_lea.vmem [#allocation7], %s214
        %v216 = vld [vmem:[%s181] sm:$0x7]
        %v217 = vld [vmem:[%s190] sm:$0x3f]
        %v218 = vld [vmem:[%s190 + $0x8] sm:$0x3f]
        %v219 = vld [vmem:[%s190 + $0x10] sm:$0x3f]
        %v220 = vlaneseq
        %v221 = vshrl.u32 %v220, 7
        %v222 = vsub.s32 0, %v221
        %v223 = vrot.slane %v216, %v222
        %v224 = vsub.f32 %v223, %v217
        %v225 = vlaneseq
        %v226 = vshrl.u32 %v225, 7
        %v227 = vsub.s32 1, %v226
        %v228 = vrot.slane %v216, %v227
        %v229 = vsub.f32 %v228, %v218
        %v230 = vlaneseq
        %v231 = vshrl.u32 %v230, 7
        %v232 = vsub.s32 2, %v231
        %v233 = vrot.slane %v216, %v232
        %v234 = vsub.f32 %v233, %v219
        %v235 = vmul.f32 %v224, %v224
        %v236 = vmul.f32 %v229, %v229
        %v237 = vadd.f32 %v235, %v236
        %v238 = vmul.f32 %v234, %v234
        %v239 = vadd.f32 %v237, %v238
        %v240 = vadd.f32 %v239, 1e-07
        %v241 = vrsqrt.pop %v240
        %v242 = vmul.f32 %v240, %v241
        %vm243 = vcmp.eq.f32.partialorder %v240, inf
        %v244 = vsel %vm243, %v240, %v242
        %vm245 = vcmp.eq.f32.partialorder %v240, 0.0
        %v246 = vand.u32 %v240, 2147483648
        %v247 = vsel %vm245, %v246, %v244
        %vm248 = vcmask 390144
        %249 = vst.msk [vmem:[%s215] sm:$0x3f] %vm248, %v247
        %v250 = vadd.f32 %v229, 1e-07
        %v251 = vadd.f32 %v224, 1e-07
        %v252 = vand.u32 2147483647, %v251
        %v253 = vand.u32 2147483647, %v250
        %v254 = vmin.f32 %v252, %v253
        %v255 = vmax.f32 %v252, %v253
        %v256 = vrcp.pop %v255
        %v257 = vmul.f32 %v254, %v256
        %v258 = vmul.f32 %v257, %v257
        %v259 = vmul.f32 0.002785687, %v258
        %v260 = vadd.f32 %v259, -0.015866
        %v261 = vmul.f32 %v260, %v258
        %v262 = vadd.f32 %v261, 0.04247222
        %v263 = vmul.f32 %v262, %v258
        %v264 = vadd.f32 %v263, -0.074975304
        %v265 = vmul.f32 %v264, %v258
        %v266 = vadd.f32 %v265, 0.1064488
        %v267 = vmul.f32 %v266, %v258
        %v268 = vadd.f32 %v267, -0.14207031
        %v269 = vmul.f32 %v268, %v258
        %v270 = vadd.f32 %v269, 0.19993454
        %v271 = vmul.f32 %v270, %v258
        %v272 = vadd.f32 %v271, -0.33333147
        %v273 = vmul.f32 %v272, %v258
        %v274 = vmul.f32 %v273, %v257
        %v275 = vadd.f32 %v274, %v257
        %vm276 = vcmp.gt.f32.partialorder %v253, %v252
        %v277 = vsub.f32 1.5707964, %v275
        %v278 = vsel %vm276, %v277, %v275
        %vm279 = vcmp.lt.f32.partialorder %v251, 0.0
        %v280 = vsub.f32 3.1415927, %v278
        %v281 = vsel %vm279, %v280, %v278
        %vm282 = vcmp.lt.s32.totalorder %v251, 0
        %v283 = vsel %vm282, 3.1415927, 0.0
        %vm284 = vcmp.eq.f32.partialorder %v250, 0.0
        %v285 = vsel %vm284, %v283, %v281
        %vm286 = vcmp.ne.f32.partialorder %v251, %v251
        %vm287 = vcmp.ne.f32.partialorder %v250, %v250
        %vm288 = vmor %vm286, %vm287
        %v289 = vsel %vm288, nan, %v285
        %vm290 = vcmp.lt.f32.partialorder %v251, 0.0
        %v291 = vsel %vm290, 2.3561945, 0.7853982
        %vm292 = vcmp.eq.s32.totalorder %v252, inf
        %vm293 = vcmp.eq.s32.totalorder %v253, inf
        %vm294 = vmand %vm292, %vm293
        %v295 = vsel %vm294, %v291, %v289
        %v296 = vand.u32 2147483647, %v295
        %v297 = vand.u32 %v250, 2147483648
        %v298 = vor.u32 %v296, %v297
        %s299 = scalar_lea.vmem %s215, 8 [#allocation7]
        %300 = vst.msk [vmem:[%s299] sm:$0x3f] %vm248, %v298
        %v301 = vadd.f32 %v237, 1e-07
        %v302 = vrsqrt.pop %v301
        %v303 = vmul.f32 %v301, %v302
        %vm304 = vcmp.eq.f32.partialorder %v301, inf
        %v305 = vsel %vm304, %v301, %v303
        %vm306 = vcmp.eq.f32.partialorder %v301, 0.0
        %v307 = vand.u32 %v301, 2147483648
        %v308 = vsel %vm306, %v307, %v305
        %v309 = vand.u32 2147483647, %v234
        %v310 = vand.u32 2147483647, %v308
        %v311 = vmin.f32 %v309, %v310
        %v312 = vmax.f32 %v309, %v310
        %v313 = vrcp.pop %v312
        %v314 = vmul.f32 %v311, %v313
        %v315 = vmul.f32 %v314, %v314
        %v316 = vmul.f32 0.002785687, %v315
        %v317 = vadd.f32 %v316, -0.015866
        %v318 = vmul.f32 %v317, %v315
        %v319 = vadd.f32 %v318, 0.04247222
        %v320 = vmul.f32 %v319, %v315
        %v321 = vadd.f32 %v320, -0.074975304
        %v322 = vmul.f32 %v321, %v315
        %v323 = vadd.f32 %v322, 0.1064488
        %v324 = vmul.f32 %v323, %v315
        %v325 = vadd.f32 %v324, -0.14207031
        %v326 = vmul.f32 %v325, %v315
        %v327 = vadd.f32 %v326, 0.19993454
        %v328 = vmul.f32 %v327, %v315
        %v329 = vadd.f32 %v328, -0.33333147
        %v330 = vmul.f32 %v329, %v315
        %v331 = vmul.f32 %v330, %v314
        %v332 = vadd.f32 %v331, %v314
        %vm333 = vcmp.gt.f32.partialorder %v310, %v309
        %v334 = vsub.f32 1.5707964, %v332
        %v335 = vsel %vm333, %v334, %v332
        %vm336 = vcmp.lt.f32.partialorder %v234, 0.0
        %v337 = vsub.f32 3.1415927, %v335
        %v338 = vsel %vm336, %v337, %v335
        %vm339 = vcmp.lt.s32.totalorder %v234, 0
        %v340 = vsel %vm339, 3.1415927, 0.0
        %vm341 = vcmp.eq.f32.partialorder %v308, 0.0
        %v342 = vsel %vm341, %v340, %v338
        %vm343 = vcmp.ne.f32.partialorder %v234, %v234
        %vm344 = vcmp.ne.f32.partialorder %v308, %v308
        %vm345 = vmor %vm343, %vm344
        %v346 = vsel %vm345, nan, %v342
        %vm347 = vcmp.lt.f32.partialorder %v234, 0.0
        %v348 = vsel %vm347, 2.3561945, 0.7853982
        %vm349 = vcmp.eq.s32.totalorder %v309, inf
        %vm350 = vcmp.eq.s32.totalorder %v310, inf
        %vm351 = vmand %vm349, %vm350
        %v352 = vsel %vm351, %v348, %v346
        %v353 = vand.u32 2147483647, %v352
        %v354 = vand.u32 %v308, 2147483648
        %v355 = vor.u32 %v353, %v354
        %s356 = scalar_lea.vmem %s215, 16 [#allocation7]
        %357 = vst.msk [vmem:[%s356] sm:$0x3f] %vm248, %v355
        %s358 = sand.u32 %s98, 1
        %s359 = scalar_lea.sflag [#allocation4], %s358
        %s360 = sand.u32 %s98, 1
        %s361 = smul.addr %s360, 24
        %s362 = scalar_lea.vmem [#allocation7], %s361
        // Predicated region
        $region37: #{tpu_custom_call.1} parent=27 // pred_check
          %p363 = pneg %p108
        $region38: #{tpu_custom_call.1} parent=27 // pred_check_branch
          %365 = sbr.rel (%p363) target = $region40
        $region39: #{tpu_custom_call.1} parent=27 // pred_region
          %s367 = ssub.s32 384, 384
          %368 = vsyncadd %s359, %s367
          %s369 = smul.addr %s26, 3
          %s370 = sadd.s32 %s27, %s369
          %s371 = smul.addr %s370, 128
          %s372 = scalar_lea.hbm %s2, %s371
          %s373 = sshll.u32 %s362, 4
          %s374 = int_to_ptr.vmem [resolvable:$true] %s373
          %379 = dma.vmem_to_hbm [thread:$0]  %s374, 384, %s372, %s359, 128, 128, 8
        $region40: #{tpu_custom_call.1} parent=27 // pred_fallthru
          _
      $region28: #{tpu_custom_call.1} parent=5 // pred_fallthru
        _
      %p380 = scmp.le.s32.totalorder 2, %s17
      // Predicated region
      $region41: #{tpu_custom_call.1} parent=5 // pred_check
        %p381 = pneg %p380
      $region42: #{tpu_custom_call.1} parent=5 // pred_check_branch
        %383 = sbr.rel (%p381) target = $region44
      $region43: #{tpu_custom_call.1} parent=5 // pred_region
        %s384 = ssub.s32 %s17, 2
        // Predicated region
        $region45: #{tpu_custom_call.1} parent=43 // pred_check
          %p385 = pneg %p114
        $region46: #{tpu_custom_call.1} parent=43 // pred_check_branch
          %387 = sbr.rel (%p385) target = $region48
        $region47: #{tpu_custom_call.1} parent=43 // pred_region
          %s388 = sand.u32 %s99, 1
          %s389 = scalar_lea.sflag [#allocation4], %s388
          %s390 = sand.u32 %s99, 1
          %s391 = smul.addr %s390, 24
          %s392 = scalar_lea.vmem [#allocation7], %s391
          %393 = dma.done %s389, 384
        $region48: #{tpu_custom_call.1} parent=43 // pred_fallthru
          _
      $region44: #{tpu_custom_call.1} parent=5 // pred_fallthru
        _
    $region6: #{tpu_custom_call.1} parent=1 // loop_footer
      %s21 = sadd.s32 1, %s17
    $region7: #{tpu_custom_call.1} parent=1 // loop_footer_branch
      %16 = sbr.rel target = $region3
    $region8: #{tpu_custom_call.1} parent=1 // loop_exit
      _
    %394 = vsyncpa [#allocation3], 1
    %s395 = scalar_lea.sflag [#allocation3], 1
    %396 = vsyncpa %s395, 1
    %397 = vsyncpa [#allocation6], 1
    %s398 = scalar_lea.sflag [#allocation6], 1
    %399 = vsyncpa %s398, 1
    %400 = vsyncpa [#allocation4], 1
    %s401 = scalar_lea.sflag [#allocation4], 1
    %402 = vsyncpa %s401, 1

</llo_original>
